<compile_context>
chip_gen: v7x
topology: tpu7x:2x2x1
jax: 0.10.0
libtpu: 0.0.40
codegen_flags: <defaults>
</compile_context>

<pallas_src>
import functools
import re

import jax
import jax.numpy as jnp
from jax.experimental import pallas as pl
from jax.experimental.pallas import tpu as pltpu


# ---------------------------------------------------------------------------
# Stage A: per-chunk statistics.
# ---------------------------------------------------------------------------
def _stats_kernel(x_ref, stats_ref, *, single_pass):
    xb = x_ref[0].astype(jnp.float32)               # (ct, nt, K)
    K = xb.shape[-1]
    inv_k = 1.0 / K
    inv_km1 = 1.0 / (K - 1)

    chunk_max = jnp.max(xb, axis=-1)                # (ct, nt)
    chunk_min = jnp.min(xb, axis=-1)

    if single_pass:
        # Single sweep: shifted sum-of-squares (shift = first sample of each
        # chunk) to avoid catastrophic cancellation when |mean| >> std.
        shift = xb[:, :, 0:1]                       # (ct, nt, 1)
        xs = xb - shift
        s1 = jnp.sum(xs, axis=-1)                   # (ct, nt)
        s2 = jnp.sum(xs * xs, axis=-1)
        base = jnp.sum(shift, axis=-1)              # squeeze via reduction
        chunk_mean = base + s1 * inv_k
        chunk_var = jnp.maximum(s2 - s1 * s1 * inv_k, 0.0) * inv_km1
    else:
        # Two-pass (centered) form: numerically safest; the second sweep over
        # the block hides under DMA on v5e/v6e.
        s1 = jnp.sum(xb, axis=-1)
        chunk_mean = s1 * inv_k
        d = xb - chunk_mean[:, :, None]
        chunk_var = jnp.sum(d * d, axis=-1) * inv_km1

    stats_ref[0, 0] = chunk_mean
    stats_ref[0, 1] = chunk_var
    stats_ref[0, 2] = chunk_max - chunk_min


# ---------------------------------------------------------------------------
# Stage B: channel/scrunched stats, GroupNorm(5,5) folded into conv1,
# 1x1 convs, LeakyReLU, SteepSigmoid.
#
# SMEM parameter packing p_ref[0, :] (73 scalars):
#   [0:50]  w1_eff (o*5 + c)   = conv1_w * gn_weight   (GN affine folded)
#   [50:60] b1_eff             = conv1_b + conv1_w @ gn_bias
#   [60:70] conv2 weight       [70] conv2 bias
#   [71]    SteepSigmoid factor  [72] SteepSigmoid bias
# ---------------------------------------------------------------------------
def _mask_kernel(stats_ref, p_ref, out_ref, *, chunk_size):
    K = chunk_size
    chunk_mean = stats_ref[0, 0]                    # (C, N)
    chunk_var = stats_ref[0, 1]
    chunk_ptp = stats_ref[0, 2]
    C, N = chunk_mean.shape
    T = N * K
    eps = 1e-5

    chunk_std = jnp.sqrt(chunk_var)

    # Per-channel stats over the full time axis, derived *exactly* from the
    # equal-size chunk statistics (no second pass over x):
    #   channel_var = sum_n[(K-1)*var_n + K*(mean_n - channel_mean)^2] / (T-1)
    channel_mean = jnp.mean(chunk_mean, axis=1, keepdims=True)          # (C, 1)
    dm = chunk_mean - channel_mean
    channel_var = jnp.sum((K - 1) * chunk_var + K * (dm * dm),
                          axis=1, keepdims=True) * (1.0 / (T - 1))
    channel_std = jnp.sqrt(channel_var)                                 # (C, 1)

    # Time-scrunched statistics (mean over the channel axis).
    scr_mean = jnp.mean(chunk_mean, axis=0, keepdims=True)              # (1, N)
    scr_std = jnp.mean(chunk_std, axis=0, keepdims=True)                # (1, N)

    feats = (
        dm,                          # mean_dev_chan
        chunk_mean - scr_mean,       # mean_dev_time
        chunk_std - channel_std,     # std_dev_chan
        chunk_std - scr_std,         # std_dev_time
        chunk_ptp,                   # chunk_ptp
    )

    # GroupNorm(5, 5) statistics (biased variance over (C, N)).  The actual
    # normalization is applied as scalar rescaling of the conv1 weights below,
    # so no normalized (C, N) feature maps are materialized.
    inv_cn = 1.0 / (C * N)
    mus, inv_stds = [], []
    for f in feats:
        mu = jnp.sum(f) * inv_cn
        fc = f - mu
        var = jnp.sum(fc * fc) * inv_cn
        mus.append(mu)
        inv_stds.append(jax.lax.rsqrt(var + eps))

    # Conv2d(5,10,1) -> LeakyReLU(0.01) -> Conv2d(10,1,1): each hidden channel
    # is accumulated directly into z so only one (C, N) accumulator stays live.
    z = None
    for o in range(10):
        a = [p_ref[0, o * 5 + c] * inv_stds[c] for c in range(5)]
        bias = p_ref[0, 50 + o]
        for c in range(5):
            bias = bias - mus[c] * a[c]
        h = feats[0] * a[0]
        for c in range(1, 5):
            h = h + feats[c] * a[c]
        h = h + bias
        h = jnp.where(h > 0, h, 0.01 * h)            # LeakyReLU(0.01)
        contrib = h * p_ref[0, 60 + o]
        z = contrib if z is None else z + contrib
    z = z + p_ref[0, 70]

    # SteepSigmoid(factor, bias)
    z = jax.nn.sigmoid(p_ref[0, 71] * z + p_ref[0, 72])
    out_ref[0] = z.astype(out_ref.dtype)


# ---------------------------------------------------------------------------
# Hardware query / tiling helpers.
# ---------------------------------------------------------------------------
def _tpu_target():
    """Return (generation, vmem_capacity_bytes) with conservative fallbacks."""
    vmem_cap = 128 * 1024 * 1024
    gen = 6
    try:
        vmem_cap = int(pltpu.get_tpu_info().vmem_capacity_bytes)
    except Exception:
        pass
    try:
        kind = jax.devices()[0].device_kind.lower()
        m = re.search(r"v(\d+)", kind)
        if m:
            gen = int(m.group(1))
    except Exception:
        pass
    return gen, vmem_cap


def _pick_tiles(B, C, N, K, elem_bytes, target_bytes):
    """Choose (ct, nt) for Stage A blocks of shape (1, ct, nt, K).

    Constraints:
      ct: 2nd-to-last dim of the (1,3,ct,nt) stats block -> multiple of 8 or C.
      nt: last dim of the stats block (multiple of 128 or N) and 2nd-to-last
          dim of the x block (multiple of 8 or N) -> multiple of 128 or N.
    Prefers the largest block under `target_bytes`, with >= 2 total grid
    steps when possible (megacore / 2 TCs on v7x).
    """
    ct_cands = [d for d in range(8, C, 8) if C % d == 0] + [C]
    nt_cands = [d for d in range(128, N, 128) if N % d == 0] + [N]
    combos = [(ct, nt) for nt in nt_cands for ct in ct_cands]

    def size(c):
        return c[0] * c[1] * K * elem_bytes

    def steps(c):
        return B * (C // c[0]) * (N // c[1])

    fitting = [c for c in combos if size(c) <= target_bytes]
    if fitting:
        multi = [c for c in fitting if steps(c) >= 2]
        pool = multi if multi else fitting
        # Largest block; prefer whole-N (fewer steps, lane-denser) on ties.
        return max(pool, key=lambda c: (size(c), c[1]))
    # Nothing fits the budget: take the smallest legal block; the caller will
    # raise vmem_limit_bytes to whatever that block actually needs.
    return min(combos, key=lambda c: (size(c), -c[1]))


def _pack_params(params):
    """Fold the GroupNorm affine into conv1 and pack everything to (1, 73)."""
    gn_w, gn_b, w1, b1, w2, b2, ss = params
    gn_w = gn_w.reshape(5).astype(jnp.float32)
    gn_b = gn_b.reshape(5).astype(jnp.float32)
    w1 = w1.reshape(10, 5).astype(jnp.float32)
    b1 = b1.reshape(10).astype(jnp.float32)
    w2 = w2.reshape(10).astype(jnp.float32)
    b2 = b2.reshape(1).astype(jnp.float32)
    ss = ss.reshape(2).astype(jnp.float32)
    w1_eff = w1 * gn_w[None, :]          # conv1 weight * GN scale
    b1_eff = b1 + w1 @ gn_b              # conv1 bias + conv1_w @ GN shift
    flat = jnp.concatenate([w1_eff.reshape(-1), b1_eff, w2, b2, ss])
    return flat.reshape(1, -1)           # (1, 73)


# ---------------------------------------------------------------------------
# Stage B fallback in plain jnp (tiny C*N, or stats block too big for VMEM).
# ---------------------------------------------------------------------------
def _stage_b_jnp(stats, params, chunk_size):
    gn_w, gn_b, w1, b1, w2, b2, ss = params
    K = chunk_size
    chunk_mean = stats[:, 0]                       # (B, C, N)
    chunk_var = stats[:, 1]
    chunk_ptp = stats[:, 2]
    _, _, N = chunk_mean.shape
    T = N * K
    chunk_std = jnp.sqrt(chunk_var)
    channel_mean = chunk_mean.mean(axis=2, keepdims=True)
    dm = chunk_mean - channel_mean
    channel_var = ((K - 1) * chunk_var + K * dm * dm).sum(
        axis=2, keepdims=True) / (T - 1)
    channel_std = jnp.sqrt(channel_var)
    scr_mean = chunk_mean.mean(axis=1, keepdims=True)
    scr_std = chunk_std.mean(axis=1, keepdims=True)
    feats = jnp.stack([dm, chunk_mean - scr_mean,
                       chunk_std - channel_std, chunk_std - scr_std,
                       chunk_ptp], axis=1)                       # (B, 5, C, N)
    mu = feats.mean(axis=(2, 3), keepdims=True)
    var = feats.var(axis=(2, 3), keepdims=True)
    normed = (feats - mu) * jax.lax.rsqrt(var + 1e-5)
    normed = normed * gn_w.reshape(1, 5, 1, 1) + gn_b.reshape(1, 5, 1, 1)
    h = jnp.einsum('oc,bcxn->boxn', w1.reshape(10, 5), normed) + b1.reshape(1, 10, 1, 1)
    h = jnp.where(h > 0, h, 0.01 * h)
    z = jnp.einsum('oc,bcxn->boxn', w2.reshape(1, 10), h) + b2.reshape(1, 1, 1, 1)
    ssf = ss.reshape(-1)
    z = jax.nn.sigmoid(ssf[0] * z + ssf[1])
    return z[:, 0]


# ---------------------------------------------------------------------------
# Wrapper
# ---------------------------------------------------------------------------
def rfi_mask_forward(x, params, chunk_size, *, single_pass_var=None):
    """x: (B, C, T) float32/bfloat16, T % chunk_size == 0.
    Returns (B, C, T // chunk_size) float32."""
    B, C, T = x.shape
    assert chunk_size > 1 and T % chunk_size == 0
    N = T // chunk_size
    K = chunk_size
    xr = x.reshape(B, C, N, K)

    gen, vmem_cap = _tpu_target()
    if single_pass_var is None:
        # v7x: HBM is fast enough that the second sweep is exposed -> fold
        # variance into the first pass.  v5e/v6e: the two-pass form hides
        # under DMA, keep the safer numerics.
        single_pass_var = gen >= 7

    # Generation-aware per-buffer block budget and VMEM limit.
    target_block = (10 << 20) if gen >= 7 else (20 << 20)
    target_block = min(target_block, vmem_cap // 5)

    elem = jnp.dtype(x.dtype).itemsize
    ct, nt = _pick_tiles(B, C, N, K, elem, target_block)

    x_block_bytes = ct * nt * K * elem
    stats_block_bytes = 3 * ct * nt * 4
    needed_a = 2 * x_block_bytes + 2 * stats_block_bytes + (2 << 20)
    vmem_limit_a = int(min(vmem_cap, max(needed_a, (3 * vmem_cap) // 4)))

    # --- Stage A: heavy streaming reduction over x.
    stats = pl.pallas_call(
        functools.partial(_stats_kernel, single_pass=single_pass_var),
        out_shape=jax.ShapeDtypeStruct((B, 3, C, N), jnp.float32),
        grid_spec=pltpu.PrefetchScalarGridSpec(
            num_scalar_prefetch=0,
            grid=(B, C // ct, N // nt),
            in_specs=[pl.BlockSpec((1, ct, nt, K),
                                   lambda b, c, n: (b, c, n, 0))],
            out_specs=pl.BlockSpec((1, 3, ct, nt),
                                   lambda b, c, n: (b, 0, c, n)),
        ),
        compiler_params=pltpu.CompilerParams(
            dimension_semantics=("parallel", "parallel", "parallel"),
            vmem_limit_bytes=vmem_limit_a),
    )(xr)

    # --- Stage B: tiny pointwise stage on the K-times-smaller stats.
    # VMEM estimate: stats + output double-buffered plus ~a dozen live (C, N)
    # f32 temporaries inside the kernel.
    needed_b = (2 * 3 + 2 * 1 + 16) * C * N * 4 + (2 << 20)
    if C * N < 4096 or needed_b > (3 * vmem_cap) // 4:
        # Tiny problems: launch/per-step overhead of a dedicated pallas_call
        # exceeds XLA fusion cost.  Huge C*N: the untiled (1,3,C,N) block would
        # blow VMEM.  Both fall back to plain jnp on the stats.
        # TODO(synk): tile Stage B over N in Pallas for very large C*N.
        return _stage_b_jnp(stats, params, chunk_size)

    p = _pack_params(params)
    vmem_limit_b = int(min(vmem_cap, max(needed_b, vmem_cap // 2)))
    mask = pl.pallas_call(
        functools.partial(_mask_kernel, chunk_size=chunk_size),
        out_shape=jax.ShapeDtypeStruct((B, C, N), jnp.float32),
        grid_spec=pltpu.PrefetchScalarGridSpec(
            num_scalar_prefetch=0,
            grid=(B,),
            in_specs=[
                pl.BlockSpec((1, 3, C, N), lambda b: (b, 0, 0, 0)),
                pl.BlockSpec((1, p.shape[1]), lambda b: (0, 0),
                             memory_space=pltpu.MemorySpace.SMEM),
            ],
            out_specs=pl.BlockSpec((1, C, N), lambda b: (b, 0, 0)),
        ),
        compiler_params=pltpu.CompilerParams(
            dimension_semantics=("parallel",),
            vmem_limit_bytes=vmem_limit_b),
    )(stats, p)
    return mask


# ---------------------------------------------------------------------------
# Pure-JAX reference mirroring the PyTorch forward (computed directly from x).
# ---------------------------------------------------------------------------
def rfi_mask_reference(x, params, chunk_size):
    gn_w, gn_b, w1, b1, w2, b2, ss = params
    B, C, T = x.shape
    N = T // chunk_size
    chunked = x.reshape(B, C, N, chunk_size)
    channel_mean = x.mean(2)
    channel_std = x.std(2, ddof=1)
    chunk_mean = chunked.mean(3)
    chunk_std = chunked.std(3, ddof=1)
    chunk_ptp = chunked.max(3) - chunked.min(3)
    scr_mean = chunk_mean.mean(1)
    scr_std = chunk_std.mean(1)
    feats = jnp.stack([
        chunk_mean - channel_mean[:, :, None],
        chunk_mean - scr_mean[:, None, :],
        chunk_std - channel_std[:, :, None],
        chunk_std - scr_std[:, None, :],
        chunk_ptp,
    ], axis=1)                                              # (B, 5, C, N)
    mu = feats.mean(axis=(2, 3), keepdims=True)
    var = feats.var(axis=(2, 3), keepdims=True)             # biased
    normed = (feats - mu) / jnp.sqrt(var + 1e-5)
    normed = normed * gn_w.reshape(1, 5, 1, 1) + gn_b.reshape(1, 5, 1, 1)
    h = jnp.einsum('oc,bcxn->boxn', w1, normed) + b1.reshape(1, 10, 1, 1)
    h = jnp.where(h > 0, h, 0.01 * h)
    z = jnp.einsum('oc,bcxn->boxn', w2, h) + b2.reshape(1, 1, 1, 1)
    z = jax.nn.sigmoid(ss[0, 0] * z + ss[0, 1])
    return z[:, 0]


def init_params(key):
    k1, k2, k3, k4 = jax.random.split(key, 4)
    gn_w = jnp.ones((5, 1), jnp.float32)      # nn.GroupNorm default affine init
    gn_b = jnp.zeros((5, 1), jnp.float32)
    w1 = jax.random.normal(k1, (10, 5), jnp.float32) * 0.4   # Conv2d(5,10,1)
    b1 = jax.random.normal(k2, (10, 1), jnp.float32) * 0.1
    w2 = jax.random.normal(k3, (1, 10), jnp.float32) * 0.3   # Conv2d(10,1,1)
    b2 = jax.random.normal(k4, (1, 1), jnp.float32) * 0.1
    ss = jnp.array([[4.0, 0.0]], jnp.float32)                # SteepSigmoid(4, 0)
    return (gn_w, gn_b, w1, b1, w2, b2, ss)


if __name__ == "__main__":
    key = jax.random.PRNGKey(0)
    key_p, key_x1, key_x2 = jax.random.split(key, 3)
    params = init_params(key_p)

    # Small case: Pallas Stage A + jnp Stage B (tiny C*N path).
    B, C, K, N = 2, 4, 128, 8
    x_small = jax.random.normal(key_x1, (B, C, N * K), jnp.float32)
    out_small = jax.block_until_ready(rfi_mask_forward(x_small, params, K))
    ref_small = rfi_mask_reference(x_small, params, K)
    assert out_small.shape == (B, C, N)
    err = jnp.max(jnp.abs(out_small - ref_small))
    assert jnp.allclose(out_small, ref_small, rtol=1e-4, atol=1e-4), (
        f"small case max abs err {err}")

    # Medium case: exercises the Pallas Stage B kernel, and both Stage A
    # variance paths (two-pass and single-pass) so the v7x code path is
    # compiled/validated regardless of the hardware we run on.
    B2, C2, K2, N2 = 2, 32, 128, 256
    x_med = (jax.random.normal(key_x2, (B2, C2, N2 * K2), jnp.float32)
             * 3.0 + 5.0)
    ref_med = rfi_mask_reference(x_med, params, K2)
    for sp in (False, True):
        out_med = jax.block_until_ready(
            rfi_mask_forward(x_med, params, K2, single_pass_var=sp))
        assert out_med.shape == (B2, C2, N2)
        err = jnp.max(jnp.abs(out_med - ref_med))
        assert jnp.allclose(out_med, ref_med, rtol=1e-4, atol=1e-4), (
            f"medium case (single_pass={sp}) max abs err {err}")

    print("KERNEL_OK")
</pallas_src>

<mosaic_0001>
module attributes {stable_mosaic.version = 11 : i64} {
  func.func @_stats_kernel(%arg0: i32, %arg1: i32, %arg2: i32, %arg3: memref<1x4x8x128xf32, #tpu.memory_space<vmem>>, %arg4: memref<1x3x4x8xf32, #tpu.memory_space<vmem>>) attributes {dimension_semantics = [#tpu.dimension_semantics<parallel>, #tpu.dimension_semantics<parallel>, #tpu.dimension_semantics<parallel>], iteration_bounds = array<i64: 2, 1, 1>, scalar_prefetch = 0 : i64, scratch_operands = 0 : i64, tpu.core_type = #tpu.core_type<tc>, window_params = [{transform_indices = @transform_0, window_bounds = array<i64: 1, 4, 8, 128>}, {transform_indices = @transform_1, window_bounds = array<i64: 1, 3, 4, 8>}]} {
    %c0 = arith.constant 0 : index
    %c0_0 = arith.constant 0 : index
    %c0_1 = arith.constant 0 : index
    %c0_2 = arith.constant 0 : index
    %0 = vector.load %arg3[%c0, %c0_0, %c0_1, %c0_2] : memref<1x4x8x128xf32, #tpu.memory_space<vmem>>, vector<1x4x8x128xf32>
    %1 = vector.shape_cast %0 : vector<1x4x8x128xf32> to vector<4x8x128xf32>
    %cst = arith.constant dense<0xFF800000> : vector<4x8xf32>
    %2 = vector.multi_reduction <maximumf>, %1, %cst [2] : vector<4x8x128xf32> to vector<4x8xf32>
    %cst_3 = arith.constant dense<0x7F800000> : vector<4x8xf32>
    %3 = vector.multi_reduction <minimumf>, %1, %cst_3 [2] : vector<4x8x128xf32> to vector<4x8xf32>
    %cst_4 = arith.constant dense<0.000000e+00> : vector<4x8xf32>
    %4 = vector.multi_reduction <add>, %1, %cst_4 [2] : vector<4x8x128xf32> to vector<4x8xf32>
    %cst_5 = arith.constant 7.812500e-03 : f32
    %5 = vector.broadcast %cst_5 : f32 to vector<4x8xf32>
    %6 = arith.mulf %4, %5 : vector<4x8xf32>
    %7 = vector.shape_cast %6 : vector<4x8xf32> to vector<4x8x1xf32>
    %8 = vector.broadcast %7 : vector<4x8x1xf32> to vector<4x8x128xf32>
    %9 = arith.subf %1, %8 : vector<4x8x128xf32>
    %10 = arith.mulf %9, %9 : vector<4x8x128xf32>
    %cst_6 = arith.constant dense<0.000000e+00> : vector<4x8xf32>
    %11 = vector.multi_reduction <add>, %10, %cst_6 [2] : vector<4x8x128xf32> to vector<4x8xf32>
    %cst_7 = arith.constant 0.00787401571 : f32
    %12 = vector.broadcast %cst_7 : f32 to vector<4x8xf32>
    %13 = arith.mulf %11, %12 : vector<4x8xf32>
    %c0_8 = arith.constant 0 : index
    %c0_9 = arith.constant 0 : index
    %c0_10 = arith.constant 0 : index
    %c0_11 = arith.constant 0 : index
    %14 = vector.load %arg4[%c0_8, %c0_9, %c0_10, %c0_11] : memref<1x3x4x8xf32, #tpu.memory_space<vmem>>, vector<1x1x4x8xf32>
    %15 = vector.shape_cast %14 : vector<1x1x4x8xf32> to vector<4x8xf32>
    %16 = vector.shape_cast %6 : vector<4x8xf32> to vector<1x1x4x8xf32>
    tpu.vector_store %arg4[%c0_8, %c0_9, %c0_10, %c0_11], %16 {strides = array<i32>} : memref<1x3x4x8xf32, #tpu.memory_space<vmem>>, vector<1x1x4x8xf32>,
    %c0_12 = arith.constant 0 : index
    %c1 = arith.constant 1 : index
    %c0_13 = arith.constant 0 : index
    %c0_14 = arith.constant 0 : index
    %17 = vector.load %arg4[%c0_12, %c1, %c0_13, %c0_14] : memref<1x3x4x8xf32, #tpu.memory_space<vmem>>, vector<1x1x4x8xf32>
    %18 = vector.shape_cast %17 : vector<1x1x4x8xf32> to vector<4x8xf32>
    %19 = vector.shape_cast %13 : vector<4x8xf32> to vector<1x1x4x8xf32>
    tpu.vector_store %arg4[%c0_12, %c1, %c0_13, %c0_14], %19 {strides = array<i32>} : memref<1x3x4x8xf32, #tpu.memory_space<vmem>>, vector<1x1x4x8xf32>,
    %20 = arith.subf %2, %3 : vector<4x8xf32>
    %c0_15 = arith.constant 0 : index
    %c2 = arith.constant 2 : index
    %c0_16 = arith.constant 0 : index
    %c0_17 = arith.constant 0 : index
    %21 = vector.load %arg4[%c0_15, %c2, %c0_16, %c0_17] : memref<1x3x4x8xf32, #tpu.memory_space<vmem>>, vector<1x1x4x8xf32>
    %22 = vector.shape_cast %21 : vector<1x1x4x8xf32> to vector<4x8xf32>
    %23 = vector.shape_cast %20 : vector<4x8xf32> to vector<1x1x4x8xf32>
    tpu.vector_store %arg4[%c0_15, %c2, %c0_16, %c0_17], %23 {strides = array<i32>} : memref<1x3x4x8xf32, #tpu.memory_space<vmem>>, vector<1x1x4x8xf32>,
    return
  }
  func.func @transform_0(%arg0: i32, %arg1: i32, %arg2: i32) -> (i32, i32, i32, i32) {
    %c0_i32 = arith.constant 0 : i32
    %c0_i32_0 = arith.constant 0 : i32
    return %arg0, %arg1, %arg2, %c0_i32 : i32, i32, i32, i32
  }
  func.func @transform_1(%arg0: i32, %arg1: i32, %arg2: i32) -> (i32, i32, i32, i32) {
    %c0_i32 = arith.constant 0 : i32
    %c0_i32_0 = arith.constant 0 : i32
    return %arg0, %c0_i32, %arg1, %arg2 : i32, i32, i32, i32
  }
}

</mosaic_0001>

<llo_original>
// kernel: tpu_custom_call.1
$region0: #{tpu_custom_call.1}
  #allocation0 [shape = 'u32[]', space=smem, size = 0x4, offset = 0x4, fixed_abs, tag = 'smem constant byte address 0x4 - core index']
  #allocation1 [shape = 'u32[144,128]{1,0:T(1,128)}', space=vmem, size = 0x12000, scoped, tag = 'internal scratch']
  %s0 = inlined_call_operand.hbm [shape: f32[2,4,8,128], index: 0, kind: input, shape index: {}]
  %s1 = inlined_call_operand.hbm [shape: f32[2,3,4,8], index: 1, kind: output, shape index: {}]
  %s2 = sld [smem:[#allocation0]]
  $region41: #{tpu_custom_call.1} parent=0
    _
  %s4 = ssub.s32 1, %s2
  %s5 = scalar_select 0, %s4, %s2
  $region1: #{tpu_custom_call.1} parent=0
    #allocation2 [shape = 'u8[32768]{0}', space=vmem, size = 0x8000, scoped, tag = 'input window, operand 0']
    #allocation3 [shape = 's32[2]{0}', space=sflag, size = 0x8, scoped, tag = 'scoped memory for tpu_custom_call.1']
    #allocation4 [shape = 's32[2]{0}', space=sflag, size = 0x8, scoped, tag = 'scoped memory for tpu_custom_call.1']
    #allocation5 [shape = 'u8[12288]{0}', space=vmem, size = 0x3000, scoped, tag = 'output window, operand 0']
    %6 = vsyncpa [#allocation3], 0
    %s7 = scalar_lea.sflag [#allocation3], 1
    %8 = vsyncpa %s7, 0
    %9 = vsyncpa [#allocation4], 0
    %s10 = scalar_lea.sflag [#allocation4], 1
    %11 = vsyncpa %s10, 0
    loop: start=0, step=1, limit=4
    $region2: #{tpu_custom_call.1} parent=1 // loop_pre_header
      _
    $region3: #{tpu_custom_call.1} parent=1 // loop_header
      %s13 = sphi 0, %s17
      %p14 = scmp.ge.s32.totalorder %s13, 4
      %s20 = sphi 0, %s39
      %s21 = sphi 0, %s35
      %s22 = sphi 0, %s31
      %s23 = sphi 0, %s20
      %s24 = sphi 0, %s21
      %s25 = sphi 0, %s22
      %s26 = sphi 0, %s23
      %s27 = sphi 0, %s24
      %s28 = sphi 0, %s25
      %s46 = sphi 0, %s48
      %s49 = sphi 0, %s46
      %s50 = sphi 0, %s49
      %s66 = sphi 0, %s50
      %s76 = sphi 0, %s78
      %s79 = sphi 0, %s76
      %s80 = sphi 0, %s79
      %s96 = sphi 0, %s80
    $region4: #{tpu_custom_call.1} parent=1 // loop_header_branch
      %16 = sbr.rel (%p14) target = $region8
    $region5: #{tpu_custom_call.1} parent=1 // loop_body
      %s18 = ssub.s32 %s13, 1
      %s19 = ssub.s32 %s13, 2
      %s29 = sadd.s32 1, %s22
      %p30 = scmp.ge.s32.totalorder %s29, 1
      %s31 = scalar_select %p30, 0, %s29
      %s32 = sadd.s32 1, %s21
      %s33 = scalar_select %p30, %s32, %s21
      %p34 = scmp.ge.s32.totalorder %s33, 1
      %s35 = scalar_select %p34, 0, %s33
      %s36 = sadd.s32 1, %s20
      %s37 = scalar_select %p34, %s36, %s20
      %p38 = scmp.ge.s32.totalorder %s37, 2
      %s39 = scalar_select %p38, 0, %s37
      %s40 = ssub.s32 %s20, %s39
      %s41 = ssub.s32 %s21, %s35
      %s42 = sor.u32 %s40, %s41
      %s43 = ssub.s32 %s22, %s31
      %s44 = sor.u32 %s42, %s43
      %p45 = scmp.eq.s32.totalorder %s44, 0
      %s47 = sadd.s32 %s46, 1
      %s48 = scalar_select %p45, %s46, %s47
      %p51 = pneg %p45
      %p52 = scmp.eq.s32.totalorder %s13, 1
      %p53 = por %p51, %p52
      %p54 = scmp.ne.s32.totalorder %s46, %s49
      %p55 = scmp.eq.s32.totalorder %s13, 0
      %p56 = por %p54, %p55
      %p57 = scmp.ne.s32.totalorder %s46, %s49
      %p58 = scmp.eq.s32.totalorder %s18, 1
      %p59 = por %p57, %p58
      %p60 = scmp.ne.s32.totalorder %s49, %s50
      %p61 = scmp.eq.s32.totalorder %s18, 0
      %p62 = por %p60, %p61
      %p63 = scmp.ne.s32.totalorder %s49, %s50
      %p64 = scmp.eq.s32.totalorder %s19, 1
      %p65 = por %p63, %p64
      %p67 = scmp.ne.s32.totalorder %s50, %s66
      %p68 = scmp.eq.s32.totalorder %s19, 0
      %p69 = por %p67, %p68
      %s70 = ssub.s32 %s20, %s39
      %s71 = ssub.s32 %s21, %s35
      %s72 = sor.u32 %s70, %s71
      %s73 = ssub.s32 %s22, %s31
      %s74 = sor.u32 %s72, %s73
      %p75 = scmp.eq.s32.totalorder %s74, 0
      %s77 = sadd.s32 %s76, 1
      %s78 = scalar_select %p75, %s76, %s77
      %p81 = pneg %p75
      %p82 = scmp.eq.s32.totalorder %s13, 1
      %p83 = por %p81, %p82
      %p84 = scmp.ne.s32.totalorder %s76, %s79
      %p85 = scmp.eq.s32.totalorder %s13, 0
      %p86 = por %p84, %p85
      %p87 = scmp.ne.s32.totalorder %s76, %s79
      %p88 = scmp.eq.s32.totalorder %s18, 1
      %p89 = por %p87, %p88
      %p90 = scmp.ne.s32.totalorder %s79, %s80
      %p91 = scmp.eq.s32.totalorder %s18, 0
      %p92 = por %p90, %p91
      %p93 = scmp.ne.s32.totalorder %s79, %s80
      %p94 = scmp.eq.s32.totalorder %s19, 1
      %p95 = por %p93, %p94
      %p97 = scmp.ne.s32.totalorder %s80, %s96
      %p98 = scmp.eq.s32.totalorder %s19, 0
      %p99 = por %p97, %p98
      %p100 = scmp.le.s32.totalorder 1, %s13
      %p101 = scmp.lt.s32.totalorder %s13, 3
      %p102 = pnand %p100, %p101
      %p103 = pneg %p102
      // Predicated region
      $region9: #{tpu_custom_call.1} parent=5 // pred_check
        _
      $region10: #{tpu_custom_call.1} parent=5 // pred_check_branch
        %105 = sbr.rel (%p102) target = $region12
      $region11: #{tpu_custom_call.1} parent=5 // pred_region
        %s106 = ssub.s32 %s13, 1
      $region12: #{tpu_custom_call.1} parent=5 // pred_fallthru
        _
      %p107 = scmp.lt.s32.totalorder %s13, 2
      // Predicated region
      $region13: #{tpu_custom_call.1} parent=5 // pred_check
        %p108 = pneg %p107
      $region14: #{tpu_custom_call.1} parent=5 // pred_check_branch
        %110 = sbr.rel (%p108) target = $region16
      $region15: #{tpu_custom_call.1} parent=5 // pred_region
        // Predicated region
        $region17: #{tpu_custom_call.1} parent=15 // pred_check
          %p111 = pneg %p56
        $region18: #{tpu_custom_call.1} parent=15 // pred_check_branch
          %113 = sbr.rel (%p111) target = $region20
        $region19: #{tpu_custom_call.1} parent=15 // pred_region
          %s114 = sand.u32 %s46, 1
          %s115 = scalar_lea.sflag [#allocation3], %s114
          %s116 = sand.u32 %s46, 1
          %s117 = smul.addr %s116, 32
          %s118 = scalar_lea.vmem [#allocation2], %s117
          %s119 = smul.u32 4, %s21
          %s121 = ssub.s32 512, 512
          %122 = vsyncadd %s115, %s121
          %s123 = sadd.s32 %s22, %s119
          %s124 = smul.addr %s20, 4
          %s125 = sadd.s32 %s123, %s124
          %s126 = smul.addr %s125, 128
          %s127 = scalar_lea.hbm %s0, %s126
          %s128 = sshll.u32 %s118, 4
          %s129 = int_to_ptr.vmem [resolvable:$true] %s128
          %134 = dma.hbm_to_vmem [thread:$0]  %s127, 512, %s129, %s115, 128, 128, 8
        $region20: #{tpu_custom_call.1} parent=15 // pred_fallthru
          _
      $region16: #{tpu_custom_call.1} parent=5 // pred_fallthru
        _
      %p135 = scmp.le.s32.totalorder 1, %s13
      %p136 = scmp.lt.s32.totalorder %s13, 3
      %p137 = pnand %p135, %p136
      %p138 = pneg %p137
      // Predicated region
      $region21: #{tpu_custom_call.1} parent=5 // pred_check
        _
      $region22: #{tpu_custom_call.1} parent=5 // pred_check_branch
        %140 = sbr.rel (%p137) target = $region24
      $region23: #{tpu_custom_call.1} parent=5 // pred_region
        %s141 = ssub.s32 %s13, 1
        %s142 = sand.u32 %s49, 1
        %s143 = scalar_lea.sflag [#allocation3], %s142
        %s144 = sand.u32 %s49, 1
        %s145 = smul.addr %s144, 32
        %s146 = scalar_lea.vmem [#allocation2], %s145
        // Predicated region
        $region25: #{tpu_custom_call.1} parent=23 // pred_check
          %p147 = pneg %p62
        $region26: #{tpu_custom_call.1} parent=23 // pred_check_branch
          %149 = sbr.rel (%p147) target = $region28
        $region27: #{tpu_custom_call.1} parent=23 // pred_region
          %150 = dma.done %s143, 512
        $region28: #{tpu_custom_call.1} parent=23 // pred_fallthru
          _
        %s151 = sand.u32 %s49, 1
        %s152 = scalar_lea.sflag [#allocation3], %s151
        %s153 = sand.u32 %s49, 1
        %s154 = smul.addr %s153, 32
        %s155 = scalar_lea.vmem [#allocation2], %s154
        %p156 = pneg %p62
        %p157 = pneg %p59
        %p158 = pneg %p92
        %p159 = pneg %p89
        %s160 = sand.u32 %s79, 1
        %s161 = scalar_lea.sflag [#allocation4], %s160
        %s162 = sand.u32 %s79, 1
        %s163 = smul.addr %s162, 12
        %s164 = scalar_lea.vmem [#allocation5], %s163
        %s165 = smul.u32 4, %s24
        %v166 = vld [vmem:[%s146] sm:$0xff]
        %v167 = vld [vmem:[%s146 + $0x8] sm:$0xff]
        %v168 = vld [vmem:[%s146 + $0x10] sm:$0xff]
        %v169 = vld [vmem:[%s146 + $0x18] sm:$0xff]
        %170 = vmax.xlane.f32.xlu0 %v166
        %v171 = vpop.xlane.xlu0 %170
        %172 = vmax.xlane.f32.xlu0 %v167
        %v173 = vpop.xlane.xlu0 %172
        %174 = vmax.xlane.f32.xlu0 %v168
        %v175 = vpop.xlane.xlu0 %174
        %176 = vmax.xlane.f32.xlu0 %v169
        %v177 = vpop.xlane.xlu0 %176
        %178 = vmin.xlane.f32.xlu0 %v166
        %v179 = vpop.xlane.xlu0 %178
        %180 = vmin.xlane.f32.xlu0 %v167
        %v181 = vpop.xlane.xlu0 %180
        %182 = vmin.xlane.f32.xlu0 %v168
        %v183 = vpop.xlane.xlu0 %182
        %184 = vmin.xlane.f32.xlu0 %v169
        %v185 = vpop.xlane.xlu0 %184
        %186 = vadd.xlane.f32.xlu0 %v166
        %v187 = vpop.xlane.xlu0 %186
        %188 = vadd.xlane.f32.xlu0 %v167
        %v189 = vpop.xlane.xlu0 %188
        %190 = vadd.xlane.f32.xlu0 %v168
        %v191 = vpop.xlane.xlu0 %190
        %192 = vadd.xlane.f32.xlu0 %v169
        %v193 = vpop.xlane.xlu0 %192
        %v194 = vmul.f32 %v187, 0.0078125
        %v195 = vmul.f32 %v189, 0.0078125
        %v196 = vmul.f32 %v191, 0.0078125
        %v197 = vmul.f32 %v193, 0.0078125
        %v198 = vsub.f32 %v166, %v194
        %v199 = vsub.f32 %v167, %v195
        %v200 = vsub.f32 %v168, %v196
        %v201 = vsub.f32 %v169, %v197
        %v202 = vmul.f32 %v198, %v198
        %v203 = vmul.f32 %v199, %v199
        %v204 = vmul.f32 %v200, %v200
        %v205 = vmul.f32 %v201, %v201
        %206 = vadd.xlane.f32.xlu0 %v202
        %v207 = vpop.xlane.xlu0 %206
        %208 = vadd.xlane.f32.xlu0 %v203
        %v209 = vpop.xlane.xlu0 %208
        %210 = vadd.xlane.f32.xlu0 %v204
        %v211 = vpop.xlane.xlu0 %210
        %212 = vadd.xlane.f32.xlu0 %v205
        %v213 = vpop.xlane.xlu0 %212
        %v214 = vmul.f32 %v207, 0.007874016
        %v215 = vmul.f32 %v209, 0.007874016
        %v216 = vmul.f32 %v211, 0.007874016
        %v217 = vmul.f32 %v213, 0.007874016
        %v222 = vlaneseq
        %v223 = vand.u32 %v222, 127
        %v224 = vlaneseq
        %v225 = vshrl.u32 %v224, 7
        %v226 = vsub.s32 %v223, %v225
        %v227 = vrot.slane %v194, %v226
        %v228 = vlaneseq
        %v229 = vshrl.u32 %v228, 7
        %v230 = vsub.s32 %v223, %v229
        %v231 = vrot.slane %v195, %v230
        %v232 = vlaneseq
        %v233 = vshrl.u32 %v232, 7
        %v234 = vsub.s32 %v223, %v233
        %v235 = vrot.slane %v196, %v234
        %v236 = vlaneseq
        %v237 = vshrl.u32 %v236, 7
        %v238 = vsub.s32 %v223, %v237
        %v239 = vrot.slane %v197, %v238
        %vm240 = vcmask 1041409
        %v241 = vsel %vm240, %v231, %v227
        %vm242 = vcmask 1042434
        %v243 = vsel %vm242, %v235, %v241
        %vm244 = vcmask 1043459
        %v245 = vsel %vm244, %v239, %v243
        %vm247 = vcmask 60416
        %248 = vst.msk [vmem:[%s164] sm:$0xf] %vm247, %v245
        %v253 = vlaneseq
        %v254 = vshrl.u32 %v253, 7
        %v255 = vsub.s32 %v223, %v254
        %v256 = vrot.slane %v214, %v255
        %v257 = vlaneseq
        %v258 = vshrl.u32 %v257, 7
        %v259 = vsub.s32 %v223, %v258
        %v260 = vrot.slane %v215, %v259
        %v261 = vlaneseq
        %v262 = vshrl.u32 %v261, 7
        %v263 = vsub.s32 %v223, %v262
        %v264 = vrot.slane %v216, %v263
        %v265 = vlaneseq
        %v266 = vshrl.u32 %v265, 7
        %v267 = vsub.s32 %v223, %v266
        %v268 = vrot.slane %v217, %v267
        %v269 = vsel %vm240, %v260, %v256
        %v270 = vsel %vm242, %v264, %v269
        %v271 = vsel %vm244, %v268, %v270
        %s273 = scalar_lea.vmem %s164, 4 [#allocation5]
        %274 = vst.msk [vmem:[%s273] sm:$0xf] %vm247, %v271
        %v275 = vsub.f32 %v171, %v179
        %v276 = vsub.f32 %v173, %v181
        %v277 = vsub.f32 %v175, %v183
        %v278 = vsub.f32 %v177, %v185
        %v283 = vlaneseq
        %v284 = vshrl.u32 %v283, 7
        %v285 = vsub.s32 %v223, %v284
        %v286 = vrot.slane %v275, %v285
        %v287 = vlaneseq
        %v288 = vshrl.u32 %v287, 7
        %v289 = vsub.s32 %v223, %v288
        %v290 = vrot.slane %v276, %v289
        %v291 = vlaneseq
        %v292 = vshrl.u32 %v291, 7
        %v293 = vsub.s32 %v223, %v292
        %v294 = vrot.slane %v277, %v293
        %v295 = vlaneseq
        %v296 = vshrl.u32 %v295, 7
        %v297 = vsub.s32 %v223, %v296
        %v298 = vrot.slane %v278, %v297
        %v299 = vsel %vm240, %v290, %v286
        %v300 = vsel %vm242, %v294, %v299
        %v301 = vsel %vm244, %v298, %v300
        %s303 = scalar_lea.vmem %s164, 8 [#allocation5]
        %304 = vst.msk [vmem:[%s303] sm:$0xf] %vm247, %v301
        %s305 = sand.u32 %s79, 1
        %s306 = scalar_lea.sflag [#allocation4], %s305
        %s307 = sand.u32 %s79, 1
        %s308 = smul.addr %s307, 12
        %s309 = scalar_lea.vmem [#allocation5], %s308
        // Predicated region
        $region29: #{tpu_custom_call.1} parent=23 // pred_check
          %p310 = pneg %p89
        $region30: #{tpu_custom_call.1} parent=23 // pred_check_branch
          %312 = sbr.rel (%p310) target = $region32
        $region31: #{tpu_custom_call.1} parent=23 // pred_region
          %s314 = ssub.s32 192, 192
          %315 = vsyncadd %s306, %s314
          %s316 = sadd.s32 %s25, %s24
          %s317 = smul.addr %s23, 3
          %s318 = sadd.s32 %s316, %s317
          %s319 = smul.addr %s318, 64
          %s320 = scalar_lea.hbm %s1, %s319
          %s321 = sshll.u32 %s309, 4
          %s322 = int_to_ptr.vmem [resolvable:$true] %s321
          %327 = dma.vmem_to_hbm [thread:$0]  %s322, 192, %s320, %s306, 64, 64, 4
        $region32: #{tpu_custom_call.1} parent=23 // pred_fallthru
          _
      $region24: #{tpu_custom_call.1} parent=5 // pred_fallthru
        _
      %p328 = scmp.le.s32.totalorder 2, %s13
      // Predicated region
      $region33: #{tpu_custom_call.1} parent=5 // pred_check
        %p329 = pneg %p328
      $region34: #{tpu_custom_call.1} parent=5 // pred_check_branch
        %331 = sbr.rel (%p329) target = $region36
      $region35: #{tpu_custom_call.1} parent=5 // pred_region
        %s332 = ssub.s32 %s13, 2
        // Predicated region
        $region37: #{tpu_custom_call.1} parent=35 // pred_check
          %p333 = pneg %p95
        $region38: #{tpu_custom_call.1} parent=35 // pred_check_branch
          %335 = sbr.rel (%p333) target = $region40
        $region39: #{tpu_custom_call.1} parent=35 // pred_region
          %s336 = sand.u32 %s80, 1
          %s337 = scalar_lea.sflag [#allocation4], %s336
          %s338 = sand.u32 %s80, 1
          %s339 = smul.addr %s338, 12
          %s340 = scalar_lea.vmem [#allocation5], %s339
          %341 = dma.done %s337, 192
        $region40: #{tpu_custom_call.1} parent=35 // pred_fallthru
          _
      $region36: #{tpu_custom_call.1} parent=5 // pred_fallthru
        _
    $region6: #{tpu_custom_call.1} parent=1 // loop_footer
      %s17 = sadd.s32 1, %s13
    $region7: #{tpu_custom_call.1} parent=1 // loop_footer_branch
      %12 = sbr.rel target = $region3
    $region8: #{tpu_custom_call.1} parent=1 // loop_exit
      _
    %342 = vsyncpa [#allocation3], 1
    %s343 = scalar_lea.sflag [#allocation3], 1
    %344 = vsyncpa %s343, 1
    %345 = vsyncpa [#allocation4], 1
    %s346 = scalar_lea.sflag [#allocation4], 1
    %347 = vsyncpa %s346, 1

</llo_original>
